<compile_context>
chip_gen: v7x
topology: tpu7x:2x2x1
jax: 0.10.0
libtpu: 0.0.40
codegen_flags: <defaults>
</compile_context>

<pallas_src>
import functools

import jax
import jax.numpy as jnp
import numpy as np
from jax.experimental import pallas as pl
from jax.experimental.pallas import tpu as pltpu

# ---- module hyperparameters (small-shape instantiation) --------------------
N_BANDS = 4
MIN_DB = -15.0
N_FFT = 128
HOP = 64                      # = N_FFT // 2 (framing / OLA / wsq-fold assume 50% overlap)
N_FREQ = N_FFT // 2 + 1       # 65
EPS = 1e-6
NORMALIZE_WAVE = False        # module default

F_PAD = 128                   # n_freq zero-padded to a full 128-lane tile
TM_MAX = 1024                 # max frame rows per grid step


def _round_up(x, m):
    return ((x + m - 1) // m) * m


# ---- deterministic "parameters": hann window + rDFT / irDFT matrices -------
@functools.lru_cache(maxsize=None)
def _base_tables(n_fft: int):
    n_freq = n_fft // 2 + 1
    n = np.arange(n_fft, dtype=np.float64)
    k = np.arange(n_freq, dtype=np.float64)
    ang = 2.0 * np.pi * n[:, None] * k[None, :] / n_fft          # (n_fft, n_freq)
    cosM = np.cos(ang).astype(np.float32)
    sinM = np.sin(ang).astype(np.float32)
    # inverse (onesided real iDFT) with conjugate-symmetry weights, incl. 1/N
    w = np.full((n_freq,), 2.0, dtype=np.float64)
    w[0] = 1.0
    w[-1] = 1.0
    ang2 = 2.0 * np.pi * k[:, None] * n[None, :] / n_fft          # (n_freq, n_fft)
    icosM = (w[:, None] / n_fft * np.cos(ang2)).astype(np.float32)
    isinM = (w[:, None] / n_fft * np.sin(ang2)).astype(np.float32)
    # periodic hann window, as torch.hann_window(n_fft)
    win = (0.5 * (1.0 - np.cos(2.0 * np.pi * n / n_fft))).astype(np.float32)
    return cosM, sinM, icosM, isinM, win


@functools.lru_cache(maxsize=None)
def _fused_tables(n_fft: int):
    """Window-folded, freq-padded, wsq-normalized fused DFT tables (bfloat16).

    Cfwd (n_fft, 2*F_PAD):   cols [0:65]    = win * cos
                             cols [128:193] = -win * sin            (rest zero)
    Cinv (2*F_PAD, n_fft):   rows [0:65]    =  icos * win / wsq_int
                             rows [128:193] = -isin * win / wsq_int (rest zero)
    where wsq_int is the (position-periodic) interior istft window-square normalizer
    for periodic Hann at 50% overlap, so OLA of the kernel output is already normalized.
    """
    cosM, sinM, icosM, isinM, win = _base_tables(n_fft)
    n_freq = n_fft // 2 + 1
    hop = n_fft // 2
    cfwd = np.zeros((n_fft, 2 * F_PAD), np.float32)
    cfwd[:, :n_freq] = win[:, None] * cosM
    cfwd[:, F_PAD:F_PAD + n_freq] = -(win[:, None] * sinM)

    wsq = win * win
    v = wsq[:hop] + wsq[hop:]                 # strictly positive for periodic Hann
    norm = np.concatenate([v, v])             # per output-sample divisor (interior)
    syn = win / norm                          # synthesis window incl. normalization

    cinv = np.zeros((2 * F_PAD, n_fft), np.float32)
    cinv[:n_freq, :] = icosM * syn[None, :]
    cinv[F_PAD:F_PAD + n_freq, :] = -(isinM * syn[None, :])
    return (jnp.asarray(cfwd, dtype=jnp.bfloat16),
            jnp.asarray(cinv, dtype=jnp.bfloat16))


# ---- random filter gains (spec_forward's filter_coeffs) ---------------------
def _filter_gains(key, batch: int, n_freq: int,
                  n_bands: int = N_BANDS, min_db: float = MIN_DB):
    # torch.rand(B, n_bands) * min_db  ->  jax.random.uniform (deterministic)
    pts = jax.random.uniform(key, (batch, n_bands), dtype=jnp.float32) * min_db
    # F.interpolate(mode='linear', align_corners=False) from n_bands -> n_freq
    i = jnp.arange(n_freq, dtype=jnp.float32)
    src = jnp.maximum((i + 0.5) * (n_bands / n_freq) - 0.5, 0.0)
    i0 = jnp.minimum(jnp.floor(src).astype(jnp.int32), n_bands - 1)
    i1 = jnp.minimum(i0 + 1, n_bands - 1)
    lam = jnp.clip(src - i0.astype(jnp.float32), 0.0, 1.0)
    coeffs = pts[:, i0] * (1.0 - lam) + pts[:, i1] * lam          # (B, n_freq)
    return jnp.power(10.0, coeffs / 20.0)                         # dB -> linear


# ---- Pallas kernel: frame -> (window+rDFT) -> gain -> (irDFT+window/wsq) ----
def _rf_kernel(xb_ref, gains_ref, cfwd_ref, cinv_ref, out_ref):
    tm = out_ref.shape[1]
    i = pl.program_id(1)
    start = pl.multiple_of(i * tm, tm)
    # build the (tm, N_FFT) frame block in VMEM from two shifted hop-row windows
    cur = xb_ref[0, pl.ds(start, tm), :].astype(jnp.bfloat16)       # frame first halves
    nxt = xb_ref[0, pl.ds(start + 1, tm), :].astype(jnp.bfloat16)   # frame second halves
    ri = jnp.dot(cur, cfwd_ref[:HOP, :], preferred_element_type=jnp.float32)
    ri = ri + jnp.dot(nxt, cfwd_ref[HOP:, :], preferred_element_type=jnp.float32)
    ri = ri * gains_ref[0]                                          # (1, 2*F_PAD) broadcast
    out_ref[0] = jnp.dot(ri.astype(jnp.bfloat16), cinv_ref[...],
                         preferred_element_type=jnp.float32)


def _rf_frames_pallas(xb, gains2, cfwd, cinv, n_frames_pad, tm):
    B, n_hops_pad, hop = xb.shape
    f2 = cfwd.shape[1]
    n_tiles = n_frames_pad // tm
    return pl.pallas_call(
        _rf_kernel,
        out_shape=jax.ShapeDtypeStruct((B, n_frames_pad, N_FFT), jnp.float32),
        grid=(B, n_tiles),
        in_specs=[
            pl.BlockSpec((1, n_hops_pad, hop), lambda b, i: (b, 0, 0)),  # hop-blocked audio
            pl.BlockSpec((1, 1, f2), lambda b, i: (b, 0, 0)),            # per-batch gains
            pl.BlockSpec((N_FFT, f2), lambda b, i: (0, 0)),              # fused fwd table
            pl.BlockSpec((f2, N_FFT), lambda b, i: (0, 0)),              # fused inv table
        ],
        out_specs=pl.BlockSpec((1, tm, N_FFT), lambda b, i: (b, i, 0)),
        compiler_params=pltpu.CompilerParams(
            dimension_semantics=("parallel", "parallel"),
            vmem_limit_bytes=64 * 1024 * 1024),
    )(xb, gains2, cfwd, cinv)


# ---- full forward (is_wave=True path) ---------------------------------------
def random_filtering_forward(x, key):
    assert N_FFT == 2 * HOP, "in-kernel framing / OLA / wsq-fold assume 50% overlap"
    B, T = x.shape
    cfwd, cinv = _fused_tables(N_FFT)
    pad = N_FFT // 2

    # STFT centering, like torch.stft(center=True, pad_mode='reflect')
    xp = jnp.pad(x, ((0, 0), (pad, pad)), mode="reflect")
    Lp = xp.shape[1]
    n_frames = 1 + (Lp - N_FFT) // HOP
    n_hops = n_frames + 1
    Lp_used = n_hops * HOP                                 # = (n_frames - 1) * HOP + N_FFT

    # frame-tile selection (keep >= 2 parallel grid steps for v7x megacore when possible)
    tm = min(TM_MAX, _round_up(n_frames, 8))
    if B == 1 and n_frames > 8:
        tm = min(tm, max(8, _round_up((n_frames + 1) // 2, 8)))
    n_tiles = -(-n_frames // tm)
    n_frames_pad = n_tiles * tm
    n_hops_pad = n_frames_pad + 1                          # kernel reads rows [0, n_frames_pad]

    # hop-blocked waveform; the kernel builds the overlapping frames from it in VMEM
    xb = xp[:, :Lp_used].reshape(B, n_hops, HOP)
    if n_hops_pad > n_hops:
        xb = jnp.pad(xb, ((0, 0), (0, n_hops_pad - n_hops), (0, 0)))

    # random band gains (dB -> linear), one tiny row per batch element, [re | im] layout
    gains = _filter_gains(key, B, N_FREQ)                  # (B, n_freq)
    g_pad = jnp.pad(gains, ((0, 0), (0, F_PAD - N_FREQ)))
    g2 = jnp.concatenate([g_pad, g_pad], axis=-1).reshape(B, 1, 2 * F_PAD)

    out_frames = _rf_frames_pallas(xb, g2, cfwd, cinv, n_frames_pad, tm)
    out_frames = out_frames[:, :n_frames, :]               # drop padded frames

    # iSTFT overlap-add as dense shifted adds (wsq normalization already folded in-table)
    first = out_frames[..., :HOP]                          # (B, Tf, HOP)
    second = out_frames[..., HOP:]                         # (B, Tf, HOP)
    ola = (jnp.pad(first, ((0, 0), (0, 1), (0, 0)))
           + jnp.pad(second, ((0, 0), (1, 0), (0, 0)))).reshape(B, (n_frames + 1) * HOP)

    out_len = (n_frames - 1) * HOP
    y = ola[:, pad:pad + out_len]
    if NORMALIZE_WAVE:
        y = y / (jnp.max(jnp.abs(y), axis=1, keepdims=True) + EPS)
    return y, gains


# ---- pure-JAX f32 reference of the full forward (sanity check) --------------
def _reference_forward(x, gains):
    B, T = x.shape
    cosM, sinM, icosM, isinM, win = _base_tables(N_FFT)
    cosM, sinM = jnp.asarray(cosM), jnp.asarray(sinM)
    icosM, isinM, win = jnp.asarray(icosM), jnp.asarray(isinM), jnp.asarray(win)
    hi = jax.lax.Precision.HIGHEST
    pad = N_FFT // 2
    xp = jnp.pad(x, ((0, 0), (pad, pad)), mode="reflect")
    Lp = xp.shape[1]
    n_frames = 1 + (Lp - N_FFT) // HOP
    idx = jnp.arange(n_frames)[:, None] * HOP + jnp.arange(N_FFT)[None, :]
    frames = xp[:, idx] * win                              # (B, Tf, N_FFT), windowed
    re = jnp.einsum("btn,nf->btf", frames, cosM, precision=hi)
    im = -jnp.einsum("btn,nf->btf", frames, sinM, precision=hi)
    re = re * gains[:, None, :]
    im = im * gains[:, None, :]
    yfr = (jnp.einsum("btf,fn->btn", re, icosM, precision=hi)
           - jnp.einsum("btf,fn->btn", im, isinM, precision=hi)) * win
    Lfull = (n_frames - 1) * HOP + N_FFT
    ola = jnp.zeros((B, Lfull), jnp.float32)
    wsq = jnp.zeros((Lfull,), jnp.float32)
    for t in range(n_frames):
        ola = ola.at[:, t * HOP:t * HOP + N_FFT].add(yfr[:, t])
        wsq = wsq.at[t * HOP:t * HOP + N_FFT].add(win * win)
    out_len = (n_frames - 1) * HOP
    return ola[:, pad:pad + out_len] / wsq[pad:pad + out_len]


if __name__ == "__main__":
    key = jax.random.PRNGKey(0)
    kx, kf = jax.random.split(key)
    B, T = 2, 512
    x = jax.random.normal(kx, (B, T), dtype=jnp.float32)

    y, gains = random_filtering_forward(x, kf)
    y = jax.block_until_ready(y)

    y_ref = _reference_forward(x, gains)
    y_np = np.asarray(y)
    ref_np = np.asarray(y_ref)

    assert y.shape == (B, T), y.shape
    assert np.all(np.isfinite(y_np))
    rel = np.linalg.norm(y_np - ref_np) / (np.linalg.norm(ref_np) + 1e-12)
    assert rel < 3e-2, f"relative L2 error too large: {rel}"
    # bf16 tables / frames -> looser elementwise tolerance than the old f32 path
    np.testing.assert_allclose(y_np, ref_np, rtol=1e-1, atol=1e-1)

    print("KERNEL_OK")
</pallas_src>

<mosaic_0001>
module attributes {stable_mosaic.version = 11 : i64} {
  func.func @_rf_kernel(%arg0: i32, %arg1: i32, %arg2: memref<1x17x64xf32, #tpu.memory_space<vmem>>, %arg3: memref<1x1x256xf32, #tpu.memory_space<vmem>>, %arg4: memref<128x256xbf16, #tpu.memory_space<vmem>>, %arg5: memref<256x128xbf16, #tpu.memory_space<vmem>>, %arg6: memref<1x16x128xf32, #tpu.memory_space<vmem>>) attributes {dimension_semantics = [#tpu.dimension_semantics<parallel>, #tpu.dimension_semantics<parallel>], iteration_bounds = array<i64: 2, 1>, scalar_prefetch = 0 : i64, scratch_operands = 0 : i64, tpu.core_type = #tpu.core_type<tc>, window_params = [{transform_indices = @transform_0, window_bounds = array<i64: 1, 17, 64>}, {transform_indices = @transform_1, window_bounds = array<i64: 1, 1, 256>}, {pipeline_mode = #tpu.pipeline_mode<synchronous>, transform_indices = @transform_2, window_bounds = array<i64: 128, 256>}, {pipeline_mode = #tpu.pipeline_mode<synchronous>, transform_indices = @transform_3, window_bounds = array<i64: 256, 128>}, {transform_indices = @transform_4, window_bounds = array<i64: 1, 16, 128>}]} {
    %c16_i32 = arith.constant 16 : i32
    %0 = arith.muli %arg1, %c16_i32 : i32
    %1 = tpu.assume_multiple %0, 16 : i32
    %c0 = arith.constant 0 : index
    %2 = arith.index_cast %1 : i32 to index
    %c0_0 = arith.constant 0 : index
    %3 = vector.load %arg2[%c0, %2, %c0_0] : memref<1x17x64xf32, #tpu.memory_space<vmem>>, vector<1x16x64xf32>
    %4 = vector.shape_cast %3 : vector<1x16x64xf32> to vector<16x64xf32>
    %5 = arith.truncf %4 : vector<16x64xf32> to vector<16x64xbf16>
    %c1_i32 = arith.constant 1 : i32
    %6 = arith.addi %1, %c1_i32 : i32
    %c0_1 = arith.constant 0 : index
    %7 = arith.index_cast %6 : i32 to index
    %c0_2 = arith.constant 0 : index
    %8 = vector.load %arg2[%c0_1, %7, %c0_2] : memref<1x17x64xf32, #tpu.memory_space<vmem>>, vector<1x16x64xf32>
    %9 = vector.shape_cast %8 : vector<1x16x64xf32> to vector<16x64xf32>
    %10 = arith.truncf %9 : vector<16x64xf32> to vector<16x64xbf16>
    %c0_3 = arith.constant 0 : index
    %c0_4 = arith.constant 0 : index
    %11 = vector.load %arg4[%c0_3, %c0_4] : memref<128x256xbf16, #tpu.memory_space<vmem>>, vector<64x256xbf16>
    %cst = arith.constant dense<0.000000e+00> : vector<16x256xf32>
    %12 = tpu.matmul %5, %11, %cst {dimension_numbers = #tpu.dot_dimension_numbers<[1], [0], [0], [1], [0, 0, 1, 1], [], []>} : vector<16x64xbf16>, vector<64x256xbf16>, vector<16x256xf32> -> vector<16x256xf32>
    %c64 = arith.constant 64 : index
    %c0_5 = arith.constant 0 : index
    %13 = vector.load %arg4[%c64, %c0_5] : memref<128x256xbf16, #tpu.memory_space<vmem>>, vector<64x256xbf16>
    %cst_6 = arith.constant dense<0.000000e+00> : vector<16x256xf32>
    %14 = tpu.matmul %10, %13, %cst_6 {dimension_numbers = #tpu.dot_dimension_numbers<[1], [0], [0], [1], [0, 0, 1, 1], [], []>} : vector<16x64xbf16>, vector<64x256xbf16>, vector<16x256xf32> -> vector<16x256xf32>
    %15 = arith.addf %12, %14 : vector<16x256xf32>
    %c0_7 = arith.constant 0 : index
    %c0_8 = arith.constant 0 : index
    %c0_9 = arith.constant 0 : index
    %16 = vector.load %arg3[%c0_7, %c0_8, %c0_9] : memref<1x1x256xf32, #tpu.memory_space<vmem>>, vector<1x1x256xf32>
    %17 = vector.shape_cast %16 : vector<1x1x256xf32> to vector<1x256xf32>
    %18 = vector.broadcast %17 : vector<1x256xf32> to vector<16x256xf32>
    %19 = arith.mulf %15, %18 : vector<16x256xf32>
    %20 = arith.truncf %19 : vector<16x256xf32> to vector<16x256xbf16>
    %c0_10 = arith.constant 0 : index
    %c0_11 = arith.constant 0 : index
    %21 = vector.load %arg5[%c0_10, %c0_11] : memref<256x128xbf16, #tpu.memory_space<vmem>>, vector<256x128xbf16>
    %cst_12 = arith.constant dense<0.000000e+00> : vector<16x128xf32>
    %22 = tpu.matmul %20, %21, %cst_12 {dimension_numbers = #tpu.dot_dimension_numbers<[1], [0], [0], [1], [0, 0, 1, 1], [], []>} : vector<16x256xbf16>, vector<256x128xbf16>, vector<16x128xf32> -> vector<16x128xf32>
    %c0_13 = arith.constant 0 : index
    %c0_14 = arith.constant 0 : index
    %c0_15 = arith.constant 0 : index
    %23 = vector.load %arg6[%c0_13, %c0_14, %c0_15] : memref<1x16x128xf32, #tpu.memory_space<vmem>>, vector<1x16x128xf32>
    %24 = vector.shape_cast %23 : vector<1x16x128xf32> to vector<16x128xf32>
    %25 = vector.shape_cast %22 : vector<16x128xf32> to vector<1x16x128xf32>
    tpu.vector_store %arg6[%c0_13, %c0_14, %c0_15], %25 {strides = array<i32>} : memref<1x16x128xf32, #tpu.memory_space<vmem>>, vector<1x16x128xf32>,
    return
  }
  func.func @transform_0(%arg0: i32, %arg1: i32) -> (i32, i32, i32) {
    %c0_i32 = arith.constant 0 : i32
    %c0_i32_0 = arith.constant 0 : i32
    %c0_i32_1 = arith.constant 0 : i32
    return %arg0, %c0_i32, %c0_i32_0 : i32, i32, i32
  }
  func.func @transform_1(%arg0: i32, %arg1: i32) -> (i32, i32, i32) {
    %c0_i32 = arith.constant 0 : i32
    %c0_i32_0 = arith.constant 0 : i32
    %c0_i32_1 = arith.constant 0 : i32
    return %arg0, %c0_i32, %c0_i32_0 : i32, i32, i32
  }
  func.func @transform_2(%arg0: i32, %arg1: i32) -> (i32, i32) {
    %c0_i32 = arith.constant 0 : i32
    %c0_i32_0 = arith.constant 0 : i32
    %c0_i32_1 = arith.constant 0 : i32
    return %c0_i32, %c0_i32_0 : i32, i32
  }
  func.func @transform_3(%arg0: i32, %arg1: i32) -> (i32, i32) {
    %c0_i32 = arith.constant 0 : i32
    %c0_i32_0 = arith.constant 0 : i32
    %c0_i32_1 = arith.constant 0 : i32
    return %c0_i32, %c0_i32_0 : i32, i32
  }
  func.func @transform_4(%arg0: i32, %arg1: i32) -> (i32, i32, i32) {
    %c0_i32 = arith.constant 0 : i32
    %c0_i32_0 = arith.constant 0 : i32
    return %arg0, %arg1, %c0_i32 : i32, i32, i32
  }
}

</mosaic_0001>

<llo_original>
// kernel: tpu_custom_call.1
$region0: #{tpu_custom_call.1}
  #allocation0 [shape = 'u32[]', space=smem, size = 0x4, offset = 0x4, fixed_abs, tag = 'smem constant byte address 0x4 - core index']
  #allocation1 [shape = 'u32[144,128]{1,0:T(1,128)}', space=vmem, size = 0x12000, scoped, tag = 'internal scratch']
  %s0 = inlined_call_operand.hbm [shape: f32[2,17,64], index: 0, kind: input, shape index: {}]
  %s1 = inlined_call_operand.hbm [shape: f32[2,1,256], index: 1, kind: input, shape index: {}]
  %s2 = inlined_call_operand.hbm [shape: bf16[128,256], index: 2, kind: input, shape index: {}]
  %s3 = inlined_call_operand.hbm [shape: bf16[256,128], index: 3, kind: input, shape index: {}]
  %s4 = inlined_call_operand.hbm [shape: f32[2,16,128], index: 4, kind: output, shape index: {}]
  %s5 = sld [smem:[#allocation0]]
  $region65: #{tpu_custom_call.1} parent=0
    _
  %s7 = ssub.s32 1, %s5
  %s8 = scalar_select 0, %s7, %s5
  $region1: #{tpu_custom_call.1} parent=0
    #allocation2 [shape = 'u8[24576]{0}', space=vmem, size = 0x6000, scoped, tag = 'input window, operand 0']
    #allocation3 [shape = 's32[2]{0}', space=sflag, size = 0x8, scoped, tag = 'scoped memory for tpu_custom_call.1']
    #allocation4 [shape = 's32[2]{0}', space=sflag, size = 0x8, scoped, tag = 'scoped memory for tpu_custom_call.1']
    #allocation5 [shape = 'u8[2048]{0}', space=vmem, size = 0x800, scoped, tag = 'input window, operand 1']
    #allocation6 [shape = 's32[2]{0}', space=sflag, size = 0x8, scoped, tag = 'scoped memory for tpu_custom_call.1']
    #allocation7 [shape = 'u8[65536]{0}', space=vmem, size = 0x10000, scoped, tag = 'input window, operand 2, single buffered']
    #allocation8 [shape = 'u8[65536]{0}', space=vmem, size = 0x10000, scoped, tag = 'input window, operand 3, single buffered']
    #allocation9 [shape = 's32[1]{0}', space=sflag, size = 0x4, scoped, tag = 'scoped memory for tpu_custom_call.1']
    #allocation10 [shape = 'u8[16384]{0}', space=vmem, size = 0x4000, scoped, tag = 'output window, operand 0']
    %9 = vsyncpa [#allocation3], 0
    %s10 = scalar_lea.sflag [#allocation3], 1
    %11 = vsyncpa %s10, 0
    %12 = vsyncpa [#allocation6], 0
    %s13 = scalar_lea.sflag [#allocation6], 1
    %14 = vsyncpa %s13, 0
    %15 = vsyncpa [#allocation9], 0
    %16 = vsyncpa [#allocation4], 0
    %s17 = scalar_lea.sflag [#allocation4], 1
    %18 = vsyncpa %s17, 0
    loop: start=0, step=1, limit=4
    $region2: #{tpu_custom_call.1} parent=1 // loop_pre_header
      _
    $region3: #{tpu_custom_call.1} parent=1 // loop_header
      %s20 = sphi 0, %s24
      %p21 = scmp.ge.s32.totalorder %s20, 4
      %s27 = sphi 0, %s39
      %s28 = sphi 0, %s35
      %s29 = sphi 0, %s27
      %s30 = sphi 0, %s28
      %s31 = sphi 0, %s29
      %s32 = sphi 0, %s30
      %s42 = sphi 0, %s44
      %s45 = sphi 0, %s42
      %s46 = sphi 0, %s45
      %s62 = sphi 0, %s46
      %s68 = sphi 0, %s70
      %s71 = sphi 0, %s68
      %s72 = sphi 0, %s71
      %s88 = sphi 0, %s72
      %s92 = sphi 0, %s92
      %s94 = sphi 0, %s92
      %s95 = sphi 0, %s94
      %s109 = sphi 0, %s95
      %s113 = sphi 0, %s113
      %s115 = sphi 0, %s113
      %s116 = sphi 0, %s115
      %s130 = sphi 0, %s116
      %s138 = sphi 0, %s140
      %s141 = sphi 0, %s138
      %s142 = sphi 0, %s141
      %s158 = sphi 0, %s142
    $region4: #{tpu_custom_call.1} parent=1 // loop_header_branch
      %23 = sbr.rel (%p21) target = $region8
    $region5: #{tpu_custom_call.1} parent=1 // loop_body
      %s25 = ssub.s32 %s20, 1
      %s26 = ssub.s32 %s20, 2
      %s33 = sadd.s32 1, %s28
      %p34 = scmp.ge.s32.totalorder %s33, 1
      %s35 = scalar_select %p34, 0, %s33
      %s36 = sadd.s32 1, %s27
      %s37 = scalar_select %p34, %s36, %s27
      %p38 = scmp.ge.s32.totalorder %s37, 2
      %s39 = scalar_select %p38, 0, %s37
      %s40 = ssub.s32 %s27, %s39
      %p41 = scmp.eq.s32.totalorder %s40, 0
      %s43 = sadd.s32 %s42, 1
      %s44 = scalar_select %p41, %s42, %s43
      %p47 = pneg %p41
      %p48 = scmp.eq.s32.totalorder %s20, 1
      %p49 = por %p47, %p48
      %p50 = scmp.ne.s32.totalorder %s42, %s45
      %p51 = scmp.eq.s32.totalorder %s20, 0
      %p52 = por %p50, %p51
      %p53 = scmp.ne.s32.totalorder %s42, %s45
      %p54 = scmp.eq.s32.totalorder %s25, 1
      %p55 = por %p53, %p54
      %p56 = scmp.ne.s32.totalorder %s45, %s46
      %p57 = scmp.eq.s32.totalorder %s25, 0
      %p58 = por %p56, %p57
      %p59 = scmp.ne.s32.totalorder %s45, %s46
      %p60 = scmp.eq.s32.totalorder %s26, 1
      %p61 = por %p59, %p60
      %p63 = scmp.ne.s32.totalorder %s46, %s62
      %p64 = scmp.eq.s32.totalorder %s26, 0
      %p65 = por %p63, %p64
      %s66 = ssub.s32 %s27, %s39
      %p67 = scmp.eq.s32.totalorder %s66, 0
      %s69 = sadd.s32 %s68, 1
      %s70 = scalar_select %p67, %s68, %s69
      %p73 = pneg %p67
      %p74 = scmp.eq.s32.totalorder %s20, 1
      %p75 = por %p73, %p74
      %p76 = scmp.ne.s32.totalorder %s68, %s71
      %p77 = scmp.eq.s32.totalorder %s20, 0
      %p78 = por %p76, %p77
      %p79 = scmp.ne.s32.totalorder %s68, %s71
      %p80 = scmp.eq.s32.totalorder %s25, 1
      %p81 = por %p79, %p80
      %p82 = scmp.ne.s32.totalorder %s71, %s72
      %p83 = scmp.eq.s32.totalorder %s25, 0
      %p84 = por %p82, %p83
      %p85 = scmp.ne.s32.totalorder %s71, %s72
      %p86 = scmp.eq.s32.totalorder %s26, 1
      %p87 = por %p85, %p86
      %p89 = scmp.ne.s32.totalorder %s72, %s88
      %p90 = scmp.eq.s32.totalorder %s26, 0
      %p91 = por %p89, %p90
      %s93 = sadd.s32 %s92, 1
      %p96 = scmp.eq.s32.totalorder %s20, 1
      %p97 = scmp.ne.s32.totalorder %s92, %s94
      %p98 = scmp.eq.s32.totalorder %s20, 0
      %p99 = por %p97, %p98
      %p100 = scmp.ne.s32.totalorder %s92, %s94
      %p101 = scmp.eq.s32.totalorder %s25, 1
      %p102 = por %p100, %p101
      %p103 = scmp.ne.s32.totalorder %s94, %s95
      %p104 = scmp.eq.s32.totalorder %s25, 0
      %p105 = por %p103, %p104
      %p106 = scmp.ne.s32.totalorder %s94, %s95
      %p107 = scmp.eq.s32.totalorder %s26, 1
      %p108 = por %p106, %p107
      %p110 = scmp.ne.s32.totalorder %s95, %s109
      %p111 = scmp.eq.s32.totalorder %s26, 0
      %p112 = por %p110, %p111
      %s114 = sadd.s32 %s113, 1
      %p117 = scmp.eq.s32.totalorder %s20, 1
      %p118 = scmp.ne.s32.totalorder %s113, %s115
      %p119 = scmp.eq.s32.totalorder %s20, 0
      %p120 = por %p118, %p119
      %p121 = scmp.ne.s32.totalorder %s113, %s115
      %p122 = scmp.eq.s32.totalorder %s25, 1
      %p123 = por %p121, %p122
      %p124 = scmp.ne.s32.totalorder %s115, %s116
      %p125 = scmp.eq.s32.totalorder %s25, 0
      %p126 = por %p124, %p125
      %p127 = scmp.ne.s32.totalorder %s115, %s116
      %p128 = scmp.eq.s32.totalorder %s26, 1
      %p129 = por %p127, %p128
      %p131 = scmp.ne.s32.totalorder %s116, %s130
      %p132 = scmp.eq.s32.totalorder %s26, 0
      %p133 = por %p131, %p132
      %s134 = ssub.s32 %s27, %s39
      %s135 = ssub.s32 %s28, %s35
      %s136 = sor.u32 %s134, %s135
      %p137 = scmp.eq.s32.totalorder %s136, 0
      %s139 = sadd.s32 %s138, 1
      %s140 = scalar_select %p137, %s138, %s139
      %p143 = pneg %p137
      %p144 = scmp.eq.s32.totalorder %s20, 1
      %p145 = por %p143, %p144
      %p146 = scmp.ne.s32.totalorder %s138, %s141
      %p147 = scmp.eq.s32.totalorder %s20, 0
      %p148 = por %p146, %p147
      %p149 = scmp.ne.s32.totalorder %s138, %s141
      %p150 = scmp.eq.s32.totalorder %s25, 1
      %p151 = por %p149, %p150
      %p152 = scmp.ne.s32.totalorder %s141, %s142
      %p153 = scmp.eq.s32.totalorder %s25, 0
      %p154 = por %p152, %p153
      %p155 = scmp.ne.s32.totalorder %s141, %s142
      %p156 = scmp.eq.s32.totalorder %s26, 1
      %p157 = por %p155, %p156
      %p159 = scmp.ne.s32.totalorder %s142, %s158
      %p160 = scmp.eq.s32.totalorder %s26, 0
      %p161 = por %p159, %p160
      %p162 = scmp.le.s32.totalorder 1, %s20
      %p163 = scmp.lt.s32.totalorder %s20, 3
      %p164 = pnand %p162, %p163
      %p165 = pneg %p164
      // Predicated region
      $region9: #{tpu_custom_call.1} parent=5 // pred_check
        _
      $region10: #{tpu_custom_call.1} parent=5 // pred_check_branch
        %167 = sbr.rel (%p164) target = $region12
      $region11: #{tpu_custom_call.1} parent=5 // pred_region
        %s168 = ssub.s32 %s20, 1
        // Predicated region
        $region13: #{tpu_custom_call.1} parent=11 // pred_check
          %p169 = pneg %p105
        $region14: #{tpu_custom_call.1} parent=11 // pred_check_branch
          %171 = sbr.rel (%p169) target = $region16
        $region15: #{tpu_custom_call.1} parent=11 // pred_region
          %s173 = ssub.s32 2048, 2048
          %174 = vsyncadd [#allocation6], %s173
          %s175 = sshll.u32 [#allocation7], 4
          %s176 = int_to_ptr.vmem [resolvable:$true] %s175
          %181 = dma.hbm_to_vmem [thread:$0]  %s2, 2048, %s176, [#allocation6], 128, 128, 8
        $region16: #{tpu_custom_call.1} parent=11 // pred_fallthru
          _
        // Predicated region
        $region17: #{tpu_custom_call.1} parent=11 // pred_check
          %p182 = pneg %p126
        $region18: #{tpu_custom_call.1} parent=11 // pred_check_branch
          %184 = sbr.rel (%p182) target = $region20
        $region19: #{tpu_custom_call.1} parent=11 // pred_region
          %s186 = ssub.s32 2048, 2048
          %187 = vsyncadd [#allocation9], %s186
          %s188 = sshll.u32 [#allocation8], 4
          %s189 = int_to_ptr.vmem [resolvable:$true] %s188
          %194 = dma.hbm_to_vmem [thread:$0]  %s3, 2048, %s189, [#allocation9], 64, 64, 4
        $region20: #{tpu_custom_call.1} parent=11 // pred_fallthru
          _
      $region12: #{tpu_custom_call.1} parent=5 // pred_fallthru
        _
      %p195 = scmp.lt.s32.totalorder %s20, 2
      // Predicated region
      $region21: #{tpu_custom_call.1} parent=5 // pred_check
        %p196 = pneg %p195
      $region22: #{tpu_custom_call.1} parent=5 // pred_check_branch
        %198 = sbr.rel (%p196) target = $region24
      $region23: #{tpu_custom_call.1} parent=5 // pred_region
        // Predicated region
        $region25: #{tpu_custom_call.1} parent=23 // pred_check
          %p199 = pneg %p52
        $region26: #{tpu_custom_call.1} parent=23 // pred_check_branch
          %201 = sbr.rel (%p199) target = $region28
        $region27: #{tpu_custom_call.1} parent=23 // pred_region
          %s202 = sand.u32 %s42, 1
          %s203 = scalar_lea.sflag [#allocation3], %s202
          %s204 = sand.u32 %s42, 1
          %s205 = smul.addr %s204, 24
          %s206 = scalar_lea.vmem [#allocation2], %s205
          %s208 = ssub.s32 384, 384
          %209 = vsyncadd %s203, %s208
          %s210 = smul.addr %s27, 3
          %s211 = smul.addr %s210, 128
          %s212 = scalar_lea.hbm %s0, %s211
          %s213 = sshll.u32 %s206, 4
          %s214 = int_to_ptr.vmem [resolvable:$true] %s213
          %219 = dma.hbm_to_vmem [thread:$0]  %s212, 384, %s214, %s203, 128, 128, 8
        $region28: #{tpu_custom_call.1} parent=23 // pred_fallthru
          _
        // Predicated region
        $region29: #{tpu_custom_call.1} parent=23 // pred_check
          %p220 = pneg %p78
        $region30: #{tpu_custom_call.1} parent=23 // pred_check_branch
          %222 = sbr.rel (%p220) target = $region32
        $region31: #{tpu_custom_call.1} parent=23 // pred_region
          %s223 = sand.u32 %s20, 1
          %s224 = scalar_lea.sflag [#allocation6], %s223
          %s225 = sand.u32 %s68, 1
          %s226 = smul.addr %s225, 2
          %s227 = scalar_lea.vmem [#allocation5], %s226
          %s229 = ssub.s32 32, 32
          %230 = vsyncadd %s224, %s229
          %s231 = smul.addr %s27, 2
          %s232 = smul.addr %s231, 16
          %s233 = scalar_lea.hbm %s1, %s232
          %s235 = sshll.u32 %s227, 4
          %s236 = int_to_ptr.vmem [resolvable:$true] %s235
          %238 = dma.hbm_to_vmem [thread:$0]  %s233, 32, %s236, %s224
        $region32: #{tpu_custom_call.1} parent=23 // pred_fallthru
          _
      $region24: #{tpu_custom_call.1} parent=5 // pred_fallthru
        _
      %p239 = scmp.le.s32.totalorder 1, %s20
      %p240 = scmp.lt.s32.totalorder %s20, 3
      %p241 = pnand %p239, %p240
      %p242 = pneg %p241
      // Predicated region
      $region33: #{tpu_custom_call.1} parent=5 // pred_check
        _
      $region34: #{tpu_custom_call.1} parent=5 // pred_check_branch
        %244 = sbr.rel (%p241) target = $region36
      $region35: #{tpu_custom_call.1} parent=5 // pred_region
        %s245 = ssub.s32 %s20, 1
        %s246 = sand.u32 %s45, 1
        %s247 = scalar_lea.sflag [#allocation3], %s246
        %s248 = sand.u32 %s45, 1
        %s249 = smul.addr %s248, 24
        %s250 = scalar_lea.vmem [#allocation2], %s249
        // Predicated region
        $region37: #{tpu_custom_call.1} parent=35 // pred_check
          %p251 = pneg %p58
        $region38: #{tpu_custom_call.1} parent=35 // pred_check_branch
          %253 = sbr.rel (%p251) target = $region40
        $region39: #{tpu_custom_call.1} parent=35 // pred_region
          %254 = dma.done %s247, 384
        $region40: #{tpu_custom_call.1} parent=35 // pred_fallthru
          _
        %s255 = sand.u32 %s25, 1
        %s256 = scalar_lea.sflag [#allocation6], %s255
        %s257 = sand.u32 %s71, 1
        %s258 = smul.addr %s257, 2
        %s259 = scalar_lea.vmem [#allocation5], %s258
        // Predicated region
        $region41: #{tpu_custom_call.1} parent=35 // pred_check
          %p260 = pneg %p84
        $region42: #{tpu_custom_call.1} parent=35 // pred_check_branch
          %262 = sbr.rel (%p260) target = $region44
        $region43: #{tpu_custom_call.1} parent=35 // pred_region
          %263 = dma.done %s256, 32
        $region44: #{tpu_custom_call.1} parent=35 // pred_fallthru
          _
        // Predicated region
        $region45: #{tpu_custom_call.1} parent=35 // pred_check
          %p264 = pneg %p105
        $region46: #{tpu_custom_call.1} parent=35 // pred_check_branch
          %266 = sbr.rel (%p264) target = $region48
        $region47: #{tpu_custom_call.1} parent=35 // pred_region
          %267 = dma.done [#allocation6], 2048
        $region48: #{tpu_custom_call.1} parent=35 // pred_fallthru
          _
        // Predicated region
        $region49: #{tpu_custom_call.1} parent=35 // pred_check
          %p268 = pneg %p126
        $region50: #{tpu_custom_call.1} parent=35 // pred_check_branch
          %270 = sbr.rel (%p268) target = $region52
        $region51: #{tpu_custom_call.1} parent=35 // pred_region
          %271 = dma.done [#allocation9], 2048
        $region52: #{tpu_custom_call.1} parent=35 // pred_fallthru
          _
        %s272 = sand.u32 %s45, 1
        %s273 = scalar_lea.sflag [#allocation3], %s272
        %s274 = sand.u32 %s45, 1
        %s275 = smul.addr %s274, 24
        %s276 = scalar_lea.vmem [#allocation2], %s275
        %p277 = pneg %p58
        %p278 = pneg %p55
        %s279 = sand.u32 %s25, 1
        %s280 = scalar_lea.sflag [#allocation6], %s279
        %s281 = sand.u32 %s71, 1
        %s282 = smul.addr %s281, 2
        %s283 = scalar_lea.vmem [#allocation5], %s282
        %p284 = pneg %p84
        %p285 = pneg %p81
        %p286 = pneg %p105
        %p287 = pneg %p102
        %p288 = pneg %p126
        %p289 = pneg %p123
        %p290 = pneg %p154
        %p291 = pneg %p151
        %s292 = sand.u32 %s141, 1
        %s293 = scalar_lea.sflag [#allocation4], %s292
        %s294 = sand.u32 %s141, 1
        %s295 = smul.addr %s294, 16
        %s296 = scalar_lea.vmem [#allocation10], %s295
        %s297 = smul.u32 2, %s30
        %s299 = smul.u32 %s30, 16
        %s300 = scalar_lea.vmem %s250, %s299 [#allocation2]
        %v301 = vld [vmem:[%s300] sm:$0xff]
        %v302 = vld [vmem:[%s300 + $0x8] sm:$0xff]
        %v303 = vpack.c.bf16 %v302, %v301
        %s304 = sadd.s32 %s299, 1
        %s305 = scalar_lea.vmem %s250, %s304 [#allocation2]
        %v306 = vld [vmem:[%s305] sm:$0xff]
        %v307 = vld [vmem:[%s305 + $0x8] sm:$0xff]
        %v308 = vpack.c.bf16 %v307, %v306
        %v309 = vld [vmem:[#allocation7] sm:$0xff]
        %v310 = vld [vmem:[#allocation7 + $0x8] sm:$0xff]
        %v311 = vld [vmem:[#allocation7 + $0x10] sm:$0xff]
        %v312 = vld [vmem:[#allocation7 + $0x18] sm:$0xff]
        %v313 = vld [vmem:[#allocation7 + $0x20] sm:$0xff]
        %v314 = vld [vmem:[#allocation7 + $0x28] sm:$0xff]
        %v315 = vld [vmem:[#allocation7 + $0x30] sm:$0xff]
        %v316 = vld [vmem:[#allocation7 + $0x38] sm:$0xff]
        %v317 = vld [vmem:[#allocation7 + $0x40] sm:$0xff]
        %v318 = vld [vmem:[#allocation7 + $0x48] sm:$0xff]
        %v319 = vld [vmem:[#allocation7 + $0x50] sm:$0xff]
        %v320 = vld [vmem:[#allocation7 + $0x58] sm:$0xff]
        %v321 = vld [vmem:[#allocation7 + $0x60] sm:$0xff]
        %v322 = vld [vmem:[#allocation7 + $0x68] sm:$0xff]
        %v323 = vld [vmem:[#allocation7 + $0x70] sm:$0xff]
        %v324 = vld [vmem:[#allocation7 + $0x78] sm:$0xff]
        %v333 = vunpack.c.l.b16 %v317
        %v334 = vunpack.c.h.b16 %v317
        %v335 = vunpack.c.l.b16 %v318
        %v336 = vunpack.c.h.b16 %v318
        %v337 = vunpack.c.l.b16 %v319
        %v338 = vunpack.c.h.b16 %v319
        %v339 = vunpack.c.l.b16 %v320
        %v340 = vunpack.c.h.b16 %v320
        %v341 = vunpack.c.l.b16 %v321
        %v342 = vunpack.c.h.b16 %v321
        %v343 = vunpack.c.l.b16 %v322
        %v344 = vunpack.c.h.b16 %v322
        %v345 = vunpack.c.l.b16 %v323
        %v346 = vunpack.c.h.b16 %v323
        %v347 = vunpack.c.l.b16 %v324
        %v348 = vunpack.c.h.b16 %v324
        %v349 = vpack.c.b16 %v335, %v333
        %v350 = vpack.c.b16 %v336, %v334
        %v351 = vpack.c.b16 %v339, %v337
        %v352 = vpack.c.b16 %v340, %v338
        %v353 = vpack.c.b16 %v343, %v341
        %v354 = vpack.c.b16 %v344, %v342
        %v355 = vpack.c.b16 %v347, %v345
        %v356 = vpack.c.b16 %v348, %v346
        %vm365 = vcmask 523264
        %v367 = vsel %vm365, %v308, 0
        %369 = vmatprep.subr.bf16.mxu0 %v350
        %370 = vmatpush1.bf16.msra.mxu0 %v349
        %371 = vmatprep.subr.bf16.mxu0 %v352
        %372 = vmatpush1.bf16.msra.mxu0 %v351
        %373 = vmatprep.subr.bf16.mxu0 %v354
        %374 = vmatpush1.bf16.msra.mxu0 %v353
        %375 = vmatprep.subr.bf16.mxu0 %v356
        %376 = vmatpush1.bf16.msra.mxu0 %v355
        %377 = vmatprep.subr.bf16.mxu0 0
        %378 = vmatpush1.bf16.msra.mxu0 0
        %379 = vmatprep.subr.bf16.mxu0 0
        %380 = vmatpush1.bf16.msra.mxu0 0
        %381 = vmatprep.subr.bf16.mxu0 0
        %382 = vmatpush1.bf16.msra.mxu0 0
        %383 = vmatprep.subr.bf16.mxu0 0
        %384 = vmatpush1.bf16.msra.mxu0 0
        %385 = vmatprep.subr.bf16.mxu0 0
        %386 = vmatpush1.bf16.msra.mxu0 0
        %387 = vmatprep.subr.bf16.mxu0 0
        %388 = vmatpush1.bf16.msra.mxu0 0
        %389 = vmatprep.subr.bf16.mxu0 0
        %390 = vmatpush1.bf16.msra.mxu0 0
        %391 = vmatprep.subr.bf16.mxu0 0
        %392 = vmatpush1.bf16.msra.mxu0 0
        %393 = vmatprep.subr.bf16.mxu0 0
        %394 = vmatpush1.bf16.msra.mxu0 0
        %395 = vmatprep.subr.bf16.mxu0 0
        %396 = vmatpush1.bf16.msra.mxu0 0
        %397 = vmatprep.subr.bf16.mxu0 0
        %398 = vmatpush1.bf16.msra.mxu0 0
        %399 = vmatprep.subr.bf16.mxu0 0
        %400 = vmatpush1.bf16.msra.mxu0 0
        %401 = vmatprep.mubr.bf16.mxu0 0
        %402 = vmatmul.mubr.bf16.gmra.mrb[0].mxu0 %v367
        %v403 = vpop.f32.mrb[0].mxu0
        %v404 = vadd.f32 0.0, %v403
        %v405 = vpop.f32.mrb[0].mxu0
        %v406 = vadd.f32 0.0, %v405
        %v407 = vpop.f32.mrb[0].mxu0
        %v408 = vadd.f32 0.0, %v407
        %v409 = vpop.f32.mrb[0].mxu0
        %v410 = vadd.f32 0.0, %v409
        %411 = vdwg.mxu0
        %v420 = vunpack.c.l.b16 %v309
        %v421 = vunpack.c.h.b16 %v309
        %v422 = vunpack.c.l.b16 %v310
        %v423 = vunpack.c.h.b16 %v310
        %v424 = vunpack.c.l.b16 %v311
        %v425 = vunpack.c.h.b16 %v311
        %v426 = vunpack.c.l.b16 %v312
        %v427 = vunpack.c.h.b16 %v312
        %v428 = vunpack.c.l.b16 %v313
        %v429 = vunpack.c.h.b16 %v313
        %v430 = vunpack.c.l.b16 %v314
        %v431 = vunpack.c.h.b16 %v314
        %v432 = vunpack.c.l.b16 %v315
        %v433 = vunpack.c.h.b16 %v315
        %v434 = vunpack.c.l.b16 %v316
        %v435 = vunpack.c.h.b16 %v316
        %v436 = vpack.c.b16 %v422, %v420
        %v437 = vpack.c.b16 %v423, %v421
        %v438 = vpack.c.b16 %v426, %v424
        %v439 = vpack.c.b16 %v427, %v425
        %v440 = vpack.c.b16 %v430, %v428
        %v441 = vpack.c.b16 %v431, %v429
        %v442 = vpack.c.b16 %v434, %v432
        %v443 = vpack.c.b16 %v435, %v433
        %v453 = vsel %vm365, %v303, 0
        %455 = vmatprep.subr.bf16.mxu0 %v437
        %456 = vmatpush1.bf16.msra.mxu0 %v436
        %457 = vmatprep.subr.bf16.mxu0 %v439
        %458 = vmatpush1.bf16.msra.mxu0 %v438
        %459 = vmatprep.subr.bf16.mxu0 %v441
        %460 = vmatpush1.bf16.msra.mxu0 %v440
        %461 = vmatprep.subr.bf16.mxu0 %v443
        %462 = vmatpush1.bf16.msra.mxu0 %v442
        %463 = vmatprep.subr.bf16.mxu0 0
        %464 = vmatpush1.bf16.msra.mxu0 0
        %465 = vmatprep.subr.bf16.mxu0 0
        %466 = vmatpush1.bf16.msra.mxu0 0
        %467 = vmatprep.subr.bf16.mxu0 0
        %468 = vmatpush1.bf16.msra.mxu0 0
        %469 = vmatprep.subr.bf16.mxu0 0
        %470 = vmatpush1.bf16.msra.mxu0 0
        %471 = vmatprep.subr.bf16.mxu0 0
        %472 = vmatpush1.bf16.msra.mxu0 0
        %473 = vmatprep.subr.bf16.mxu0 0
        %474 = vmatpush1.bf16.msra.mxu0 0
        %475 = vmatprep.subr.bf16.mxu0 0
        %476 = vmatpush1.bf16.msra.mxu0 0
        %477 = vmatprep.subr.bf16.mxu0 0
        %478 = vmatpush1.bf16.msra.mxu0 0
        %479 = vmatprep.subr.bf16.mxu0 0
        %480 = vmatpush1.bf16.msra.mxu0 0
        %481 = vmatprep.subr.bf16.mxu0 0
        %482 = vmatpush1.bf16.msra.mxu0 0
        %483 = vmatprep.subr.bf16.mxu0 0
        %484 = vmatpush1.bf16.msra.mxu0 0
        %485 = vmatprep.subr.bf16.mxu0 0
        %486 = vmatpush1.bf16.msra.mxu0 0
        %487 = vmatprep.mubr.bf16.mxu0 0
        %488 = vmatmul.mubr.bf16.gmra.mrb[0].mxu0 %v453
        %v489 = vpop.f32.mrb[0].mxu0
        %v490 = vadd.f32 %v404, %v489
        %v491 = vpop.f32.mrb[0].mxu0
        %v492 = vadd.f32 %v406, %v491
        %v493 = vpop.f32.mrb[0].mxu0
        %v494 = vadd.f32 %v408, %v493
        %v495 = vpop.f32.mrb[0].mxu0
        %v496 = vadd.f32 %v410, %v495
        %497 = vdwg.mxu0
        %v498 = vld [vmem:[%s259] sm:$0x3]
        %v500 = vlaneseq
        %v501 = vshrl.u32 %v500, 7
        %v502 = vsub.s32 0, %v501
        %v503 = vrot.slane %v498, %v502
        %v504 = vlaneseq
        %v505 = vshrl.u32 %v504, 7
        %v506 = vsub.s32 1, %v505
        %v507 = vrot.slane %v498, %v506
        %v510 = vmul.f32 %v490, %v503
        %v511 = vmul.f32 %v492, %v507
        %v512 = vmul.f32 %v494, %v503
        %v513 = vmul.f32 %v496, %v507
        %v514 = vpack.c.bf16 %v512, %v510
        %v515 = vpack.c.bf16 %v513, %v511
        %v516 = vld [vmem:[#allocation8] sm:$0xf]
        %v517 = vld [vmem:[#allocation8 + $0x4] sm:$0xf]
        %v518 = vld [vmem:[#allocation8 + $0x8] sm:$0xf]
        %v519 = vld [vmem:[#allocation8 + $0xc] sm:$0xf]
        %v520 = vld [vmem:[#allocation8 + $0x10] sm:$0xf]
        %v521 = vld [vmem:[#allocation8 + $0x14] sm:$0xf]
        %v522 = vld [vmem:[#allocation8 + $0x18] sm:$0xf]
        %v523 = vld [vmem:[#allocation8 + $0x1c] sm:$0xf]
        %v524 = vld [vmem:[#allocation8 + $0x20] sm:$0xf]
        %v525 = vld [vmem:[#allocation8 + $0x24] sm:$0xf]
        %v526 = vld [vmem:[#allocation8 + $0x28] sm:$0xf]
        %v527 = vld [vmem:[#allocation8 + $0x2c] sm:$0xf]
        %v528 = vld [vmem:[#allocation8 + $0x30] sm:$0xf]
        %v529 = vld [vmem:[#allocation8 + $0x34] sm:$0xf]
        %v530 = vld [vmem:[#allocation8 + $0x38] sm:$0xf]
        %v531 = vld [vmem:[#allocation8 + $0x3c] sm:$0xf]
        %v532 = vld [vmem:[#allocation8 + $0x40] sm:$0xf]
        %v533 = vld [vmem:[#allocation8 + $0x44] sm:$0xf]
        %v534 = vld [vmem:[#allocation8 + $0x48] sm:$0xf]
        %v535 = vld [vmem:[#allocation8 + $0x4c] sm:$0xf]
        %v536 = vld [vmem:[#allocation8 + $0x50] sm:$0xf]
        %v537 = vld [vmem:[#allocation8 + $0x54] sm:$0xf]
        %v538 = vld [vmem:[#allocation8 + $0x58] sm:$0xf]
        %v539 = vld [vmem:[#allocation8 + $0x5c] sm:$0xf]
        %v540 = vld [vmem:[#allocation8 + $0x60] sm:$0xf]
        %v541 = vld [vmem:[#allocation8 + $0x64] sm:$0xf]
        %v542 = vld [vmem:[#allocation8 + $0x68] sm:$0xf]
        %v543 = vld [vmem:[#allocation8 + $0x6c] sm:$0xf]
        %v544 = vld [vmem:[#allocation8 + $0x70] sm:$0xf]
        %v545 = vld [vmem:[#allocation8 + $0x74] sm:$0xf]
        %v546 = vld [vmem:[#allocation8 + $0x78] sm:$0xf]
        %v547 = vld [vmem:[#allocation8 + $0x7c] sm:$0xf]
        %v580 = vunpack.c.l.b16 %v516
        %v581 = vunpack.c.l.b16 %v517
        %v582 = vunpack.c.l.b16 %v518
        %v583 = vunpack.c.l.b16 %v519
        %v584 = vunpack.c.l.b16 %v520
        %v585 = vunpack.c.l.b16 %v521
        %v586 = vunpack.c.l.b16 %v522
        %v587 = vunpack.c.l.b16 %v523
        %v588 = vunpack.c.l.b16 %v524
        %v589 = vunpack.c.l.b16 %v525
        %v590 = vunpack.c.l.b16 %v526
        %v591 = vunpack.c.l.b16 %v527
        %v592 = vunpack.c.l.b16 %v528
        %v593 = vunpack.c.l.b16 %v529
        %v594 = vunpack.c.l.b16 %v530
        %v595 = vunpack.c.l.b16 %v531
        %v596 = vunpack.c.l.b16 %v532
        %v597 = vunpack.c.l.b16 %v533
        %v598 = vunpack.c.l.b16 %v534
        %v599 = vunpack.c.l.b16 %v535
        %v600 = vunpack.c.l.b16 %v536
        %v601 = vunpack.c.l.b16 %v537
        %v602 = vunpack.c.l.b16 %v538
        %v603 = vunpack.c.l.b16 %v539
        %v604 = vunpack.c.l.b16 %v540
        %v605 = vunpack.c.l.b16 %v541
        %v606 = vunpack.c.l.b16 %v542
        %v607 = vunpack.c.l.b16 %v543
        %v608 = vunpack.c.l.b16 %v544
        %v609 = vunpack.c.l.b16 %v545
        %v610 = vunpack.c.l.b16 %v546
        %v611 = vunpack.c.l.b16 %v547
        %v612 = vpack.c.b16 %v581, %v580
        %v613 = vpack.c.b16 %v583, %v582
        %v614 = vpack.c.b16 %v585, %v584
        %v615 = vpack.c.b16 %v587, %v586
        %v616 = vpack.c.b16 %v589, %v588
        %v617 = vpack.c.b16 %v591, %v590
        %v618 = vpack.c.b16 %v593, %v592
        %v619 = vpack.c.b16 %v595, %v594
        %v620 = vpack.c.b16 %v597, %v596
        %v621 = vpack.c.b16 %v599, %v598
        %v622 = vpack.c.b16 %v601, %v600
        %v623 = vpack.c.b16 %v603, %v602
        %v624 = vpack.c.b16 %v605, %v604
        %v625 = vpack.c.b16 %v607, %v606
        %v626 = vpack.c.b16 %v609, %v608
        %v627 = vpack.c.b16 %v611, %v610
        %644 = vmatprep.subr.bf16.mxu0 0
        %645 = vmatpush1.bf16.msra.mxu0 %v612
        %646 = vmatprep.subr.bf16.mxu0 0
        %647 = vmatpush1.bf16.msra.mxu0 %v613
        %648 = vmatprep.subr.bf16.mxu0 0
        %649 = vmatpush1.bf16.msra.mxu0 %v614
        %650 = vmatprep.subr.bf16.mxu0 0
        %651 = vmatpush1.bf16.msra.mxu0 %v615
        %652 = vmatprep.subr.bf16.mxu0 0
        %653 = vmatpush1.bf16.msra.mxu0 %v616
        %654 = vmatprep.subr.bf16.mxu0 0
        %655 = vmatpush1.bf16.msra.mxu0 %v617
        %656 = vmatprep.subr.bf16.mxu0 0
        %657 = vmatpush1.bf16.msra.mxu0 %v618
        %658 = vmatprep.subr.bf16.mxu0 0
        %659 = vmatpush1.bf16.msra.mxu0 %v619
        %660 = vmatprep.subr.bf16.mxu0 0
        %661 = vmatpush1.bf16.msra.mxu0 %v620
        %662 = vmatprep.subr.bf16.mxu0 0
        %663 = vmatpush1.bf16.msra.mxu0 %v621
        %664 = vmatprep.subr.bf16.mxu0 0
        %665 = vmatpush1.bf16.msra.mxu0 %v622
        %666 = vmatprep.subr.bf16.mxu0 0
        %667 = vmatpush1.bf16.msra.mxu0 %v623
        %668 = vmatprep.subr.bf16.mxu0 0
        %669 = vmatpush1.bf16.msra.mxu0 %v624
        %670 = vmatprep.subr.bf16.mxu0 0
        %671 = vmatpush1.bf16.msra.mxu0 %v625
        %672 = vmatprep.subr.bf16.mxu0 0
        %673 = vmatpush1.bf16.msra.mxu0 %v626
        %674 = vmatprep.subr.bf16.mxu0 0
        %675 = vmatpush1.bf16.msra.mxu0 %v627
        %676 = vmatprep.mubr.bf16.mxu0 %v515
        %677 = vmatmul.mubr.bf16.gmra.mrb[0].mxu0 %v514
        %v678 = vpop.f32.mrb[0].mxu0
        %v679 = vadd.f32 0.0, %v678
        %v680 = vpop.f32.mrb[0].mxu0
        %v681 = vpop.f32.mrb[0].mxu0
        %v682 = vadd.f32 0.0, %v681
        %v683 = vpop.f32.mrb[0].mxu0
        %684 = vdwg.mxu0
        %685 = vst [vmem:[%s296] sm:$0xff] %v679
        %686 = vst [vmem:[%s296 + $0x8] sm:$0xff] %v682
        %s687 = sand.u32 %s141, 1
        %s688 = scalar_lea.sflag [#allocation4], %s687
        %s689 = sand.u32 %s141, 1
        %s690 = smul.addr %s689, 16
        %s691 = scalar_lea.vmem [#allocation10], %s690
        // Predicated region
        $region53: #{tpu_custom_call.1} parent=35 // pred_check
          %p692 = pneg %p151
        $region54: #{tpu_custom_call.1} parent=35 // pred_check_branch
          %694 = sbr.rel (%p692) target = $region56
        $region55: #{tpu_custom_call.1} parent=35 // pred_region
          %s695 = smul.u32 2, %s30
          %s697 = ssub.s32 256, 256
          %698 = vsyncadd %s688, %s697
          %s699 = smul.addr %s29, 2
          %s700 = sadd.s32 %s695, %s699
          %s701 = smul.addr %s700, 128
          %s702 = scalar_lea.hbm %s4, %s701
          %s703 = sshll.u32 %s691, 4
          %s704 = int_to_ptr.vmem [resolvable:$true] %s703
          %709 = dma.vmem_to_hbm [thread:$0]  %s704, 256, %s702, %s688, 128, 128, 8
        $region56: #{tpu_custom_call.1} parent=35 // pred_fallthru
          _
      $region36: #{tpu_custom_call.1} parent=5 // pred_fallthru
        _
      %p710 = scmp.le.s32.totalorder 2, %s20
      // Predicated region
      $region57: #{tpu_custom_call.1} parent=5 // pred_check
        %p711 = pneg %p710
      $region58: #{tpu_custom_call.1} parent=5 // pred_check_branch
        %713 = sbr.rel (%p711) target = $region60
      $region59: #{tpu_custom_call.1} parent=5 // pred_region
        %s714 = ssub.s32 %s20, 2
        // Predicated region
        $region61: #{tpu_custom_call.1} parent=59 // pred_check
          %p715 = pneg %p157
        $region62: #{tpu_custom_call.1} parent=59 // pred_check_branch
          %717 = sbr.rel (%p715) target = $region64
        $region63: #{tpu_custom_call.1} parent=59 // pred_region
          %s718 = sand.u32 %s142, 1
          %s719 = scalar_lea.sflag [#allocation4], %s718
          %s720 = sand.u32 %s142, 1
          %s721 = smul.addr %s720, 16
          %s722 = scalar_lea.vmem [#allocation10], %s721
          %723 = dma.done %s719, 256
        $region64: #{tpu_custom_call.1} parent=59 // pred_fallthru
          _
      $region60: #{tpu_custom_call.1} parent=5 // pred_fallthru
        _
    $region6: #{tpu_custom_call.1} parent=1 // loop_footer
      %s24 = sadd.s32 1, %s20
    $region7: #{tpu_custom_call.1} parent=1 // loop_footer_branch
      %19 = sbr.rel target = $region3
    $region8: #{tpu_custom_call.1} parent=1 // loop_exit
      _
    %724 = vsyncpa [#allocation3], 1
    %s725 = scalar_lea.sflag [#allocation3], 1
    %726 = vsyncpa %s725, 1
    %727 = vsyncpa [#allocation6], 1
    %s728 = scalar_lea.sflag [#allocation6], 1
    %729 = vsyncpa %s728, 1
    %730 = vsyncpa [#allocation9], 1
    %731 = vsyncpa [#allocation4], 1
    %s732 = scalar_lea.sflag [#allocation4], 1
    %733 = vsyncpa %s732, 1

</llo_original>
